<compile_context>
chip_gen: v7x
topology: tpu7x:2x2x1
jax: 0.10.0
libtpu: 0.0.40
codegen_flags: <defaults>
</compile_context>

<pallas_src>
import functools

import jax
import jax.numpy as jnp
from jax.experimental import pallas as pl
from jax.experimental.pallas import tpu as pltpu


def _round_up(x, m):
    return ((x + m - 1) // m) * m


def _mean_pool_kernel(x_ref, o_ref, acc_ref, *, inv_s):
    """x_ref: (TB, TS, Hp) tile; o_ref: (TB, Hp); acc_ref: (TB, Hp) f32 scratch."""
    s_idx = pl.program_id(1)

    @pl.when(s_idx == 0)
    def _init():
        acc_ref[...] = jnp.zeros_like(acc_ref)

    # Hot loop: pure load + f32 accumulate (sublane reduction on the VPU/XLU).
    acc_ref[...] += jnp.sum(x_ref[...].astype(jnp.float32), axis=1)

    @pl.when(s_idx == pl.num_programs(1) - 1)
    def _finalize():
        o_ref[...] = (acc_ref[...] * inv_s).astype(o_ref.dtype)


def mean_pooling(x, *, target_block_bytes=2 * 1024 * 1024):
    """Pallas equivalent of torch.mean(x, dim=1) for a 3-D (B, S, H) float input."""
    assert x.ndim == 3, "expected (B, S, H)"
    # torch.mean rejects integer inputs without an explicit dtype; mirror that.
    assert jnp.issubdtype(x.dtype, jnp.floating), "mean_pooling expects a floating dtype"

    B, S, H = x.shape
    itemsize = jnp.dtype(x.dtype).itemsize

    # ---- tile selection ------------------------------------------------------
    Hp = _round_up(H, 128)            # lane-dense output (multiple of 128 lanes)
    Sp = _round_up(S, 8)              # sublane-aligned reduction axis

    row_bytes = Sp * Hp * itemsize    # one batch row, full (padded) sequence
    if 8 * row_bytes <= 2 * target_block_bytes:
        # Full sequence fits comfortably per block: one reduction step, grow TB.
        TS = Sp
        TB = (target_block_bytes // max(row_bytes, 1)) // 8 * 8
        TB = max(8, min(TB, _round_up(B, 8)))
    else:
        # Long sequence: keep TB minimal, tile the reduction axis instead.
        TB = 8
        TS = (target_block_bytes // (TB * Hp * itemsize)) // 8 * 8
        TS = max(8, min(TS, Sp))
    # TODO(synk): for extremely large H (H*itemsize >> target_block_bytes) an
    # additional H-tiling grid axis would be needed; not required at these sizes.

    Bp = _round_up(B, TB)
    Sp = _round_up(S, TS)

    # ---- zero-pad to tile boundaries (zeros don't change the sum; we divide
    # ---- by the ORIGINAL S, so the mean stays exact) ---------------------------
    if (Bp, Sp, Hp) != (B, S, H):
        x = jnp.pad(x, ((0, Bp - B), (0, Sp - S), (0, Hp - H)))

    grid = (Bp // TB, Sp // TS)
    kernel = functools.partial(_mean_pool_kernel, inv_s=float(1.0 / S))

    # Double-buffered input + output + f32 accumulator; stays well under every
    # generation's VMEM (v5e scoped 16 MiB default, v7x 64 MiB physical).
    est_vmem = (2 * TB * TS * Hp * itemsize     # input double buffer
                + 2 * TB * Hp * itemsize        # output double buffer
                + TB * Hp * 4)                  # f32 accumulator scratch
    vmem_limit = int(min(max(2 * est_vmem, 32 * 1024 * 1024), 48 * 1024 * 1024))

    out = pl.pallas_call(
        kernel,
        out_shape=jax.ShapeDtypeStruct((Bp, Hp), x.dtype),
        grid_spec=pltpu.PrefetchScalarGridSpec(
            num_scalar_prefetch=0,
            grid=grid,
            in_specs=[pl.BlockSpec((TB, TS, Hp), lambda b, s: (b, s, 0))],
            out_specs=pl.BlockSpec((TB, Hp), lambda b, s: (b, 0)),
            scratch_shapes=[pltpu.VMEM((TB, Hp), jnp.float32)],
        ),
        compiler_params=pltpu.CompilerParams(
            # batch axis shards across TensorCores; reduction axis stays serial.
            dimension_semantics=("parallel", "arbitrary"),
            vmem_limit_bytes=vmem_limit,
        ),
        cost_estimate=pl.CostEstimate(
            flops=B * S * H,
            transcendentals=0,
            bytes_accessed=B * S * H * itemsize + B * H * itemsize,
        ),
    )(x)

    # Strip batch / hidden padding.
    return out[:B, :H]


if __name__ == "__main__":
    key = jax.random.PRNGKey(0)
    B, S, H = 2, 8, 32
    x = jax.random.normal(key, (B, S, H), dtype=jnp.float32)

    out = mean_pooling(x)
    jax.block_until_ready(out)

    ref = jnp.mean(x, axis=1)
    assert out.shape == (B, H)
    assert jnp.allclose(out, ref, atol=1e-6), "f32 mismatch vs reference"

    # Second check: ragged batch, non-multiple-of-8 sequence, bf16 input.
    x2 = jax.random.normal(jax.random.PRNGKey(1), (5, 37, 256), dtype=jnp.bfloat16)
    out2 = mean_pooling(x2)
    jax.block_until_ready(out2)
    ref2 = jnp.mean(x2.astype(jnp.float32), axis=1).astype(jnp.bfloat16)
    assert out2.shape == (5, 256)
    assert jnp.allclose(out2.astype(jnp.float32), ref2.astype(jnp.float32),
                        atol=2e-2), "bf16 mismatch vs reference"

    print("KERNEL_OK")
</pallas_src>

<mosaic_0001>
module attributes {stable_mosaic.version = 11 : i64} {
  func.func @_mean_pool_kernel(%arg0: i32, %arg1: i32, %arg2: memref<8x8x128xf32, #tpu.memory_space<vmem>>, %arg3: memref<8x128xf32, #tpu.memory_space<vmem>>, %arg4: memref<8x128xf32, #tpu.memory_space<vmem>>) attributes {dimension_semantics = [#tpu.dimension_semantics<parallel>, #tpu.dimension_semantics<arbitrary>], iteration_bounds = array<i64: 1, 1>, scalar_prefetch = 0 : i64, scratch_operands = 1 : i64, tpu.core_type = #tpu.core_type<tc>, window_params = [{transform_indices = @transform_0, window_bounds = array<i64: 8, 8, 128>}, {transform_indices = @transform_1, window_bounds = array<i64: 8, 128>}]} {
    %c0_i32 = arith.constant 0 : i32
    %0 = arith.cmpi eq, %arg1, %c0_i32 : i32
    %1 = arith.extui %0 : i1 to i32
    %c0_i32_0 = arith.constant 0 : i32
    %2 = arith.cmpi ne, %1, %c0_i32_0 : i32
    scf.if %2 {
      %cst_9 = arith.constant 0.000000e+00 : f32
      %11 = vector.broadcast %cst_9 : f32 to vector<8x128xf32>
      %c0_10 = arith.constant 0 : index
      %c0_11 = arith.constant 0 : index
      %12 = vector.load %arg4[%c0_10, %c0_11] : memref<8x128xf32, #tpu.memory_space<vmem>>, vector<8x128xf32>
      tpu.vector_store %arg4[%c0_10, %c0_11], %11 {strides = array<i32>} : memref<8x128xf32, #tpu.memory_space<vmem>>, vector<8x128xf32>,
    } else {
    }
    %c0 = arith.constant 0 : index
    %c0_1 = arith.constant 0 : index
    %3 = vector.load %arg4[%c0, %c0_1] : memref<8x128xf32, #tpu.memory_space<vmem>>, vector<8x128xf32>
    %c0_2 = arith.constant 0 : index
    %c0_3 = arith.constant 0 : index
    %c0_4 = arith.constant 0 : index
    %4 = vector.load %arg2[%c0_2, %c0_3, %c0_4] : memref<8x8x128xf32, #tpu.memory_space<vmem>>, vector<8x8x128xf32>
    %cst = arith.constant dense<0.000000e+00> : vector<8x128xf32>
    %5 = vector.multi_reduction <add>, %4, %cst [1] : vector<8x8x128xf32> to vector<8x128xf32>
    %6 = arith.addf %3, %5 : vector<8x128xf32>
    %c0_5 = arith.constant 0 : index
    %c0_6 = arith.constant 0 : index
    %7 = vector.load %arg4[%c0_5, %c0_6] : memref<8x128xf32, #tpu.memory_space<vmem>>, vector<8x128xf32>
    tpu.vector_store %arg4[%c0_5, %c0_6], %6 {strides = array<i32>} : memref<8x128xf32, #tpu.memory_space<vmem>>, vector<8x128xf32>,
    %c0_i32_7 = arith.constant 0 : i32
    %8 = arith.cmpi eq, %arg1, %c0_i32_7 : i32
    %9 = arith.extui %8 : i1 to i32
    %c0_i32_8 = arith.constant 0 : i32
    %10 = arith.cmpi ne, %9, %c0_i32_8 : i32
    scf.if %10 {
      %c0_9 = arith.constant 0 : index
      %c0_10 = arith.constant 0 : index
      %11 = vector.load %arg4[%c0_9, %c0_10] : memref<8x128xf32, #tpu.memory_space<vmem>>, vector<8x128xf32>
      %cst_11 = arith.constant 1.250000e-01 : f32
      %12 = vector.broadcast %cst_11 : f32 to vector<8x128xf32>
      %13 = arith.mulf %11, %12 : vector<8x128xf32>
      %c0_12 = arith.constant 0 : index
      %c0_13 = arith.constant 0 : index
      %14 = vector.load %arg3[%c0_12, %c0_13] : memref<8x128xf32, #tpu.memory_space<vmem>>, vector<8x128xf32>
      tpu.vector_store %arg3[%c0_12, %c0_13], %13 {strides = array<i32>} : memref<8x128xf32, #tpu.memory_space<vmem>>, vector<8x128xf32>,
    } else {
    }
    return
  }
  func.func @transform_0(%arg0: i32, %arg1: i32) -> (i32, i32, i32) {
    %c0_i32 = arith.constant 0 : i32
    %c0_i32_0 = arith.constant 0 : i32
    return %arg0, %arg1, %c0_i32 : i32, i32, i32
  }
  func.func @transform_1(%arg0: i32, %arg1: i32) -> (i32, i32) {
    %c0_i32 = arith.constant 0 : i32
    %c0_i32_0 = arith.constant 0 : i32
    return %arg0, %c0_i32 : i32, i32
  }
}

</mosaic_0001>

<llo_original>
// kernel: tpu_custom_call.1
$region0: #{tpu_custom_call.1}
  #allocation0 [shape = 'u32[]', space=smem, size = 0x4, offset = 0x4, fixed_abs, tag = 'smem constant byte address 0x4 - core index']
  #allocation1 [shape = 'u32[144,128]{1,0:T(1,128)}', space=vmem, size = 0x12000, scoped, tag = 'internal scratch']
  #allocation2 [shape = 'f32[8,128]{1,0:T(8,128)}', space=vmem, size = 0x1000, scoped, tag = 'scratch operand']
  %s0 = inlined_call_operand.hbm [shape: f32[8,8,128], index: 0, kind: input, shape index: {}]
  %s1 = inlined_call_operand.hbm [shape: f32[8,128], index: 1, kind: output, shape index: {}]
  %s2 = sld [smem:[#allocation0]]
  $region26: #{tpu_custom_call.1} parent=0
    _
  %s4 = ssub.s32 1, %s2
  %s5 = scalar_select 0, %s4, %s2
  $region1: #{tpu_custom_call.1} parent=0
    #allocation3 [shape = 'u8[32768]{0}', space=vmem, size = 0x8000, scoped, tag = 'input window, operand 0, single buffered']
    #allocation4 [shape = 's32[1]{0}', space=sflag, size = 0x4, scoped, tag = 'scoped memory for tpu_custom_call.1']
    #allocation5 [shape = 's32[1]{0}', space=sflag, size = 0x4, scoped, tag = 'scoped memory for tpu_custom_call.1']
    #allocation6 [shape = 'u8[4096]{0}', space=vmem, size = 0x1000, scoped, tag = 'output window, operand 0, single buffered']
    %6 = vsyncpa [#allocation4], 0
    %7 = vsyncpa [#allocation5], 0
    // Predicated region
    $region2: #{tpu_custom_call.1} parent=1 // pred_check
      _
    $region3: #{tpu_custom_call.1} parent=1 // pred_check_branch
      %9 = sbr.rel (0) target = $region5
    $region4: #{tpu_custom_call.1} parent=1 // pred_region
      %s11 = ssub.s32 1024, 1024
      %12 = vsyncadd [#allocation4], %s11
      %s13 = sshll.u32 [#allocation3], 4
      %s14 = int_to_ptr.vmem [resolvable:$true] %s13
      %19 = dma.hbm_to_vmem [thread:$0]  %s0, 1024, %s14, [#allocation4], 128, 128, 8
    $region5: #{tpu_custom_call.1} parent=1 // pred_fallthru
      _
    // Predicated region
    $region6: #{tpu_custom_call.1} parent=1 // pred_check
      _
    $region7: #{tpu_custom_call.1} parent=1 // pred_check_branch
      %21 = sbr.rel (0) target = $region9
    $region8: #{tpu_custom_call.1} parent=1 // pred_region
      %22 = dma.done [#allocation4], 1024
    $region9: #{tpu_custom_call.1} parent=1 // pred_fallthru
      _
    %p23 = scmp.eq.s32.totalorder 0, 0
    // Predicated region
    $region10: #{tpu_custom_call.1} parent=1 // pred_check
      %p24 = pneg %p23
    $region11: #{tpu_custom_call.1} parent=1 // pred_check_branch
      %26 = sbr.rel (%p24) target = $region13
    $region12: #{tpu_custom_call.1} parent=1 // pred_region
      %27 = vst [vmem:[#allocation2] sm:$0xff] 0.0
    $region13: #{tpu_custom_call.1} parent=1 // pred_fallthru
      _
    %v28 = vld [vmem:[#allocation2] sm:$0xff]
    %v29 = vld [vmem:[#allocation3] sm:$0xff]
    %v30 = vld [vmem:[#allocation3 + $0x8] sm:$0xff]
    %v31 = vld [vmem:[#allocation3 + $0x10] sm:$0xff]
    %v32 = vld [vmem:[#allocation3 + $0x18] sm:$0xff]
    %v33 = vld [vmem:[#allocation3 + $0x20] sm:$0xff]
    %v34 = vld [vmem:[#allocation3 + $0x28] sm:$0xff]
    %v35 = vld [vmem:[#allocation3 + $0x30] sm:$0xff]
    %v36 = vld [vmem:[#allocation3 + $0x38] sm:$0xff]
    %v37 = vrot.slane %v29, 4
    %v38 = vadd.f32 %v29, %v37
    %v39 = vrot.slane %v38, 2
    %v40 = vadd.f32 %v38, %v39
    %v41 = vrot.slane %v40, 1
    %v42 = vadd.f32 %v40, %v41
    %v43 = vrot.slane %v30, 4
    %v44 = vadd.f32 %v30, %v43
    %v45 = vrot.slane %v44, 2
    %v46 = vadd.f32 %v44, %v45
    %v47 = vrot.slane %v46, 1
    %v48 = vadd.f32 %v46, %v47
    %v49 = vrot.slane %v31, 4
    %v50 = vadd.f32 %v31, %v49
    %v51 = vrot.slane %v50, 2
    %v52 = vadd.f32 %v50, %v51
    %v53 = vrot.slane %v52, 1
    %v54 = vadd.f32 %v52, %v53
    %v55 = vrot.slane %v32, 4
    %v56 = vadd.f32 %v32, %v55
    %v57 = vrot.slane %v56, 2
    %v58 = vadd.f32 %v56, %v57
    %v59 = vrot.slane %v58, 1
    %v60 = vadd.f32 %v58, %v59
    %v61 = vrot.slane %v33, 4
    %v62 = vadd.f32 %v33, %v61
    %v63 = vrot.slane %v62, 2
    %v64 = vadd.f32 %v62, %v63
    %v65 = vrot.slane %v64, 1
    %v66 = vadd.f32 %v64, %v65
    %v67 = vrot.slane %v34, 4
    %v68 = vadd.f32 %v34, %v67
    %v69 = vrot.slane %v68, 2
    %v70 = vadd.f32 %v68, %v69
    %v71 = vrot.slane %v70, 1
    %v72 = vadd.f32 %v70, %v71
    %v73 = vrot.slane %v35, 4
    %v74 = vadd.f32 %v35, %v73
    %v75 = vrot.slane %v74, 2
    %v76 = vadd.f32 %v74, %v75
    %v77 = vrot.slane %v76, 1
    %v78 = vadd.f32 %v76, %v77
    %v79 = vrot.slane %v36, 4
    %v80 = vadd.f32 %v36, %v79
    %v81 = vrot.slane %v80, 2
    %v82 = vadd.f32 %v80, %v81
    %v83 = vrot.slane %v82, 1
    %v84 = vadd.f32 %v82, %v83
    %vm93 = vcmask 1041409
    %v94 = vsel %vm93, %v48, %v42
    %vm95 = vcmask 1042434
    %v96 = vsel %vm95, %v54, %v94
    %vm97 = vcmask 1043459
    %v98 = vsel %vm97, %v60, %v96
    %vm99 = vcmask 1044484
    %v100 = vsel %vm99, %v66, %v98
    %vm101 = vcmask 1045509
    %v102 = vsel %vm101, %v72, %v100
    %vm103 = vcmask 1046534
    %v104 = vsel %vm103, %v78, %v102
    %vm105 = vcmask 1047559
    %v106 = vsel %vm105, %v84, %v104
    %v108 = vadd.f32 %v28, %v106
    %109 = vst [vmem:[#allocation2] sm:$0xff] %v108
    // Predicated region
    $region14: #{tpu_custom_call.1} parent=1 // pred_check
      %p110 = pneg %p23
    $region15: #{tpu_custom_call.1} parent=1 // pred_check_branch
      %112 = sbr.rel (%p110) target = $region17
    $region16: #{tpu_custom_call.1} parent=1 // pred_region
      %v113 = vld [vmem:[#allocation2] sm:$0xff]
      %v114 = vmul.f32 %v113, 0.125
      %115 = vst [vmem:[#allocation6] sm:$0xff] %v114
    $region17: #{tpu_custom_call.1} parent=1 // pred_fallthru
      _
    // Predicated region
    $region18: #{tpu_custom_call.1} parent=1 // pred_check
      _
    $region19: #{tpu_custom_call.1} parent=1 // pred_check_branch
      %117 = sbr.rel (0) target = $region21
    $region20: #{tpu_custom_call.1} parent=1 // pred_region
      %s119 = ssub.s32 128, 128
      %120 = vsyncadd [#allocation5], %s119
      %s122 = sshll.u32 [#allocation6], 4
      %s123 = int_to_ptr.vmem [resolvable:$true] %s122
      %125 = dma.vmem_to_hbm [thread:$0]  %s123, 128, %s1, [#allocation5]
    $region21: #{tpu_custom_call.1} parent=1 // pred_fallthru
      _
    // Predicated region
    $region22: #{tpu_custom_call.1} parent=1 // pred_check
      _
    $region23: #{tpu_custom_call.1} parent=1 // pred_check_branch
      %127 = sbr.rel (0) target = $region25
    $region24: #{tpu_custom_call.1} parent=1 // pred_region
      %128 = dma.done [#allocation5], 128
    $region25: #{tpu_custom_call.1} parent=1 // pred_fallthru
      _
    %129 = vsyncpa [#allocation4], 1
    %130 = vsyncpa [#allocation5], 1

</llo_original>
